<compile_context>
chip_gen: v7x
topology: tpu7x:2x2x1
jax: 0.10.0
libtpu: 0.0.40
codegen_flags: <defaults>
</compile_context>

<pallas_src>
import functools

import jax
import jax.numpy as jnp
from jax.experimental import pallas as pl
from jax.experimental.pallas import tpu as pltpu


def _macro_soft_f1_kernel(y_ref, logit_ref, cost_ref,
                          tp_acc, denom_acc,
                          *, batch_size, batch_tile):
    b = pl.program_id(1)  # batch (reduction) axis

    @pl.when(b == 0)
    def _init():
        tp_acc[...] = jnp.zeros_like(tp_acc)
        denom_acc[...] = jnp.zeros_like(denom_acc)

    # Per-element math in f32 (storage dtype may be narrower; v5e has no bf16 VPU).
    y = y_ref[...].astype(jnp.float32)
    y_hat = jax.nn.sigmoid(logit_ref[...].astype(jnp.float32))

    tp_term = y_hat * y           # tp contribution
    denom_term = y + y_hat        # (tp+fn) + (tp+fp) contribution

    # Mask padded rows of the last partial batch tile (static check: no cost
    # when the batch divides evenly into tiles).
    if batch_size % batch_tile != 0:
        rows = jax.lax.broadcasted_iota(jnp.int32, y.shape, 0) + b * batch_tile
        valid = rows < batch_size
        tp_term = jnp.where(valid, tp_term, 0.0)
        denom_term = jnp.where(valid, denom_term, 0.0)

    tp_acc[...] += jnp.sum(tp_term, axis=0, keepdims=True)
    denom_acc[...] += jnp.sum(denom_term, axis=0, keepdims=True)

    @pl.when(b == pl.num_programs(1) - 1)
    def _finalize():
        # cost = 1 - 2*tp / (2*tp + fn + fp + eps), with 2*tp+fn+fp = denom_acc
        cost_ref[...] = 1.0 - (2.0 * tp_acc[...]) / (denom_acc[...] + 1e-16)


def _choose_label_tile(n_labels):
    # Last block dim must be a multiple of 128 or the full array extent.
    if n_labels % 128 != 0:
        return n_labels
    for cand in (2048, 1024, 512, 256, 128):
        if n_labels % cand == 0:
            return cand
    return n_labels


def _choose_batch_tile(batch, row_bytes):
    # Target ~16 MiB total for the double-buffered input tiles
    # (both inputs x 2 pipeline buffers).
    budget = 16 * 1024 * 1024
    tb = budget // max(1, 2 * row_bytes)
    tb = max(8, (tb // 8) * 8)
    tb = min(tb, 1024)
    if tb >= batch:
        return batch
    return tb


def macro_soft_f1_loss(y, logit, *, batch_tile=None):
    """y: (B, L) targets (any numeric dtype); logit: (B, L) logits.

    Returns a scalar f32 matching MacroSoftF1Loss.forward: mean over labels of
    1 - soft-F1, where per-label stats are summed over the batch of
    sigmoid(logit) probabilities.
    """
    assert y.shape == logit.shape and y.ndim == 2
    B, L = y.shape

    tl = _choose_label_tile(L)
    row_bytes = tl * (jnp.dtype(y.dtype).itemsize + jnp.dtype(logit.dtype).itemsize)
    if batch_tile is None:
        tb = _choose_batch_tile(B, row_bytes)
    else:
        tb = min(int(batch_tile), B)

    n_label_tiles = L // tl
    n_batch_tiles = pl.cdiv(B, tb)

    # Explicit VMEM budget: double-buffered input tiles + accumulators/output
    # + headroom.  Stays well inside the 32 MiB scoped default on v6e/v7x.
    needed = 2 * tb * row_bytes + 6 * tl * 4 + (2 << 20)
    vmem_limit = int(min(64 << 20, max(16 << 20, needed)))

    kernel = functools.partial(_macro_soft_f1_kernel,
                               batch_size=B, batch_tile=tb)

    cost_per_label = pl.pallas_call(
        kernel,
        out_shape=jax.ShapeDtypeStruct((1, L), jnp.float32),
        grid_spec=pltpu.PrefetchScalarGridSpec(
            num_scalar_prefetch=0,
            grid=(n_label_tiles, n_batch_tiles),
            in_specs=[
                pl.BlockSpec((tb, tl), lambda j, b: (b, j)),
                pl.BlockSpec((tb, tl), lambda j, b: (b, j)),
            ],
            out_specs=pl.BlockSpec((1, tl), lambda j, b: (0, j)),
            scratch_shapes=[
                pltpu.VMEM((1, tl), jnp.float32),  # tp
                pltpu.VMEM((1, tl), jnp.float32),  # sum(y) + sum(y_hat)
            ],
        ),
        compiler_params=pltpu.CompilerParams(
            dimension_semantics=("parallel", "arbitrary"),
            vmem_limit_bytes=vmem_limit,
        ),
    )(y, logit)

    # Tiny macro-average over labels (lane-dense (1, L) -> scalar) in the wrapper.
    return jnp.mean(cost_per_label)


def _reference(y, logit):
    y = y.astype(jnp.float32)
    y_hat = jax.nn.sigmoid(logit.astype(jnp.float32))
    tp = jnp.sum(y_hat * y, axis=0)
    fp = jnp.sum(y_hat * (1.0 - y), axis=0)
    fn = jnp.sum((1.0 - y_hat) * y, axis=0)
    soft_f1 = 2.0 * tp / (2.0 * tp + fn + fp + 1e-16)
    return jnp.mean(1.0 - soft_f1)


if __name__ == "__main__":
    key = jax.random.PRNGKey(0)
    k1, k2, k3, k4 = jax.random.split(key, 4)

    # Case 1: small shapes matching the module docstring (single tile path).
    B1, L1 = 8, 16
    y1 = jax.random.bernoulli(k1, p=0.3, shape=(B1, L1)).astype(jnp.int32)
    logit1 = jax.random.normal(k2, (B1, L1), dtype=jnp.float32)
    loss1 = jax.block_until_ready(macro_soft_f1_loss(y1, logit1))
    ref1 = jax.block_until_ready(_reference(y1, logit1))
    assert jnp.allclose(loss1, ref1, atol=1e-5, rtol=1e-5), (loss1, ref1)

    # Case 2: exercises the tiled path — label-split grid (L=256 -> two
    # 128-lane tiles) and multiple batch tiles with a masked partial last tile
    # (B=20, TB=8).
    B2, L2 = 20, 256
    y2 = jax.random.bernoulli(k3, p=0.3, shape=(B2, L2)).astype(jnp.int32)
    logit2 = jax.random.normal(k4, (B2, L2), dtype=jnp.float32)
    loss2 = jax.block_until_ready(macro_soft_f1_loss(y2, logit2, batch_tile=8))
    ref2 = jax.block_until_ready(_reference(y2, logit2))
    assert jnp.allclose(loss2, ref2, atol=1e-5, rtol=1e-5), (loss2, ref2)

    print("KERNEL_OK")
</pallas_src>

<mosaic_0001>
module attributes {stable_mosaic.version = 11 : i64} {
  func.func @_macro_soft_f1_kernel(%arg0: i32, %arg1: i32, %arg2: memref<8x16xi32, #tpu.memory_space<vmem>>, %arg3: memref<8x16xf32, #tpu.memory_space<vmem>>, %arg4: memref<1x16xf32, #tpu.memory_space<vmem>>, %arg5: memref<1x16xf32, #tpu.memory_space<vmem>>, %arg6: memref<1x16xf32, #tpu.memory_space<vmem>>) attributes {dimension_semantics = [#tpu.dimension_semantics<parallel>, #tpu.dimension_semantics<arbitrary>], iteration_bounds = array<i64: 1, 1>, scalar_prefetch = 0 : i64, scratch_operands = 2 : i64, tpu.core_type = #tpu.core_type<tc>, window_params = [{transform_indices = @transform_0, window_bounds = array<i64: 8, 16>}, {transform_indices = @transform_1, window_bounds = array<i64: 8, 16>}, {transform_indices = @transform_2, window_bounds = array<i64: 1, 16>}]} {
    %c0_i32 = arith.constant 0 : i32
    %0 = arith.cmpi eq, %arg1, %c0_i32 : i32
    %1 = arith.extui %0 : i1 to i32
    %c0_i32_0 = arith.constant 0 : i32
    %2 = arith.cmpi ne, %1, %c0_i32_0 : i32
    scf.if %2 {
      %cst_16 = arith.constant 0.000000e+00 : f32
      %26 = vector.broadcast %cst_16 : f32 to vector<1x16xf32>
      %c0_17 = arith.constant 0 : index
      %c0_18 = arith.constant 0 : index
      %27 = vector.load %arg5[%c0_17, %c0_18] : memref<1x16xf32, #tpu.memory_space<vmem>>, vector<1x16xf32>
      tpu.vector_store %arg5[%c0_17, %c0_18], %26 {strides = array<i32>} : memref<1x16xf32, #tpu.memory_space<vmem>>, vector<1x16xf32>,
      %cst_19 = arith.constant 0.000000e+00 : f32
      %28 = vector.broadcast %cst_19 : f32 to vector<1x16xf32>
      %c0_20 = arith.constant 0 : index
      %c0_21 = arith.constant 0 : index
      %29 = vector.load %arg6[%c0_20, %c0_21] : memref<1x16xf32, #tpu.memory_space<vmem>>, vector<1x16xf32>
      tpu.vector_store %arg6[%c0_20, %c0_21], %28 {strides = array<i32>} : memref<1x16xf32, #tpu.memory_space<vmem>>, vector<1x16xf32>,
    } else {
    }
    %c0 = arith.constant 0 : index
    %c0_1 = arith.constant 0 : index
    %3 = vector.load %arg2[%c0, %c0_1] : memref<8x16xi32, #tpu.memory_space<vmem>>, vector<8x16xi32>
    %4 = arith.sitofp %3 : vector<8x16xi32> to vector<8x16xf32>
    %c0_2 = arith.constant 0 : index
    %c0_3 = arith.constant 0 : index
    %5 = vector.load %arg3[%c0_2, %c0_3] : memref<8x16xf32, #tpu.memory_space<vmem>>, vector<8x16xf32>
    %6 = arith.negf %5 : vector<8x16xf32>
    %7 = math.exp %6 : vector<8x16xf32>
    %cst = arith.constant 1.000000e+00 : f32
    %8 = vector.broadcast %cst : f32 to vector<8x16xf32>
    %9 = arith.addf %8, %7 : vector<8x16xf32>
    %10 = arith.divf %8, %9 : vector<8x16xf32>
    %11 = arith.mulf %10, %4 : vector<8x16xf32>
    %12 = arith.addf %4, %10 : vector<8x16xf32>
    %c0_4 = arith.constant 0 : index
    %c0_5 = arith.constant 0 : index
    %13 = vector.load %arg5[%c0_4, %c0_5] : memref<1x16xf32, #tpu.memory_space<vmem>>, vector<1x16xf32>
    %cst_6 = arith.constant dense<0.000000e+00> : vector<16xf32>
    %14 = vector.multi_reduction <add>, %11, %cst_6 [0] : vector<8x16xf32> to vector<16xf32>
    %15 = vector.shape_cast %14 : vector<16xf32> to vector<1x16xf32>
    %16 = arith.addf %13, %15 : vector<1x16xf32>
    %c0_7 = arith.constant 0 : index
    %c0_8 = arith.constant 0 : index
    %17 = vector.load %arg5[%c0_7, %c0_8] : memref<1x16xf32, #tpu.memory_space<vmem>>, vector<1x16xf32>
    tpu.vector_store %arg5[%c0_7, %c0_8], %16 {strides = array<i32>} : memref<1x16xf32, #tpu.memory_space<vmem>>, vector<1x16xf32>,
    %c0_9 = arith.constant 0 : index
    %c0_10 = arith.constant 0 : index
    %18 = vector.load %arg6[%c0_9, %c0_10] : memref<1x16xf32, #tpu.memory_space<vmem>>, vector<1x16xf32>
    %cst_11 = arith.constant dense<0.000000e+00> : vector<16xf32>
    %19 = vector.multi_reduction <add>, %12, %cst_11 [0] : vector<8x16xf32> to vector<16xf32>
    %20 = vector.shape_cast %19 : vector<16xf32> to vector<1x16xf32>
    %21 = arith.addf %18, %20 : vector<1x16xf32>
    %c0_12 = arith.constant 0 : index
    %c0_13 = arith.constant 0 : index
    %22 = vector.load %arg6[%c0_12, %c0_13] : memref<1x16xf32, #tpu.memory_space<vmem>>, vector<1x16xf32>
    tpu.vector_store %arg6[%c0_12, %c0_13], %21 {strides = array<i32>} : memref<1x16xf32, #tpu.memory_space<vmem>>, vector<1x16xf32>,
    %c0_i32_14 = arith.constant 0 : i32
    %23 = arith.cmpi eq, %arg1, %c0_i32_14 : i32
    %24 = arith.extui %23 : i1 to i32
    %c0_i32_15 = arith.constant 0 : i32
    %25 = arith.cmpi ne, %24, %c0_i32_15 : i32
    scf.if %25 {
      %c0_16 = arith.constant 0 : index
      %c0_17 = arith.constant 0 : index
      %26 = vector.load %arg5[%c0_16, %c0_17] : memref<1x16xf32, #tpu.memory_space<vmem>>, vector<1x16xf32>
      %cst_18 = arith.constant 2.000000e+00 : f32
      %27 = vector.broadcast %cst_18 : f32 to vector<1x16xf32>
      %28 = arith.mulf %27, %26 : vector<1x16xf32>
      %c0_19 = arith.constant 0 : index
      %c0_20 = arith.constant 0 : index
      %29 = vector.load %arg6[%c0_19, %c0_20] : memref<1x16xf32, #tpu.memory_space<vmem>>, vector<1x16xf32>
      %cst_21 = arith.constant 1.000000e-16 : f32
      %30 = vector.broadcast %cst_21 : f32 to vector<1x16xf32>
      %31 = arith.addf %29, %30 : vector<1x16xf32>
      %32 = arith.divf %28, %31 : vector<1x16xf32>
      %cst_22 = arith.constant 1.000000e+00 : f32
      %33 = vector.broadcast %cst_22 : f32 to vector<1x16xf32>
      %34 = arith.subf %33, %32 : vector<1x16xf32>
      %c0_23 = arith.constant 0 : index
      %c0_24 = arith.constant 0 : index
      %35 = vector.load %arg4[%c0_23, %c0_24] : memref<1x16xf32, #tpu.memory_space<vmem>>, vector<1x16xf32>
      tpu.vector_store %arg4[%c0_23, %c0_24], %34 {strides = array<i32>} : memref<1x16xf32, #tpu.memory_space<vmem>>, vector<1x16xf32>,
    } else {
    }
    return
  }
  func.func @transform_0(%arg0: i32, %arg1: i32) -> (i32, i32) {
    %c0_i32 = arith.constant 0 : i32
    return %arg1, %arg0 : i32, i32
  }
  func.func @transform_1(%arg0: i32, %arg1: i32) -> (i32, i32) {
    %c0_i32 = arith.constant 0 : i32
    return %arg1, %arg0 : i32, i32
  }
  func.func @transform_2(%arg0: i32, %arg1: i32) -> (i32, i32) {
    %c0_i32 = arith.constant 0 : i32
    %c0_i32_0 = arith.constant 0 : i32
    return %c0_i32, %arg0 : i32, i32
  }
}

</mosaic_0001>

<llo_original>
// kernel: tpu_custom_call.1
$region0: #{tpu_custom_call.1}
  #allocation0 [shape = 'u32[]', space=smem, size = 0x4, offset = 0x4, fixed_abs, tag = 'smem constant byte address 0x4 - core index']
  #allocation1 [shape = 'u32[144,128]{1,0:T(1,128)}', space=vmem, size = 0x12000, scoped, tag = 'internal scratch']
  #allocation2 [shape = 'f32[1,16]{1,0:T(1,128)}', space=vmem, size = 0x200, scoped, tag = 'scratch operand']
  #allocation3 [shape = 'f32[1,16]{1,0:T(1,128)}', space=vmem, size = 0x200, scoped, tag = 'scratch operand']
  %s0 = inlined_call_operand.hbm [shape: s32[8,16], index: 0, kind: input, shape index: {}]
  %s1 = inlined_call_operand.hbm [shape: f32[8,16], index: 1, kind: input, shape index: {}]
  %s2 = inlined_call_operand.hbm [shape: f32[1,16], index: 2, kind: output, shape index: {}]
  %s3 = sld [smem:[#allocation0]]
  $region34: #{tpu_custom_call.1} parent=0
    _
  %s5 = ssub.s32 1, %s3
  %s6 = scalar_select 0, %s5, %s3
  $region1: #{tpu_custom_call.1} parent=0
    #allocation4 [shape = 'u8[4096]{0}', space=vmem, size = 0x1000, scoped, tag = 'input window, operand 0, single buffered']
    #allocation5 [shape = 's32[1]{0}', space=sflag, size = 0x4, scoped, tag = 'scoped memory for tpu_custom_call.1']
    #allocation6 [shape = 's32[1]{0}', space=sflag, size = 0x4, scoped, tag = 'scoped memory for tpu_custom_call.1']
    #allocation7 [shape = 'u8[4096]{0}', space=vmem, size = 0x1000, scoped, tag = 'input window, operand 1, single buffered']
    #allocation8 [shape = 's32[1]{0}', space=sflag, size = 0x4, scoped, tag = 'scoped memory for tpu_custom_call.1']
    #allocation9 [shape = 'u8[512]{0}', space=vmem, size = 0x400, scoped, tag = 'output window, operand 0, single buffered']
    %7 = vsyncpa [#allocation5], 0
    %8 = vsyncpa [#allocation8], 0
    %9 = vsyncpa [#allocation6], 0
    // Predicated region
    $region2: #{tpu_custom_call.1} parent=1 // pred_check
      _
    $region3: #{tpu_custom_call.1} parent=1 // pred_check_branch
      %11 = sbr.rel (0) target = $region5
    $region4: #{tpu_custom_call.1} parent=1 // pred_region
      %s13 = ssub.s32 128, 128
      %14 = vsyncadd [#allocation5], %s13
      %s16 = sshll.u32 [#allocation4], 4
      %s17 = int_to_ptr.vmem [resolvable:$true] %s16
      %19 = dma.hbm_to_vmem [thread:$0]  %s0, 128, %s17, [#allocation5]
    $region5: #{tpu_custom_call.1} parent=1 // pred_fallthru
      _
    // Predicated region
    $region6: #{tpu_custom_call.1} parent=1 // pred_check
      _
    $region7: #{tpu_custom_call.1} parent=1 // pred_check_branch
      %21 = sbr.rel (0) target = $region9
    $region8: #{tpu_custom_call.1} parent=1 // pred_region
      %s23 = ssub.s32 128, 128
      %24 = vsyncadd [#allocation8], %s23
      %s26 = sshll.u32 [#allocation7], 4
      %s27 = int_to_ptr.vmem [resolvable:$true] %s26
      %29 = dma.hbm_to_vmem [thread:$0]  %s1, 128, %s27, [#allocation8]
    $region9: #{tpu_custom_call.1} parent=1 // pred_fallthru
      _
    // Predicated region
    $region10: #{tpu_custom_call.1} parent=1 // pred_check
      _
    $region11: #{tpu_custom_call.1} parent=1 // pred_check_branch
      %31 = sbr.rel (0) target = $region13
    $region12: #{tpu_custom_call.1} parent=1 // pred_region
      %32 = dma.done [#allocation5], 128
    $region13: #{tpu_custom_call.1} parent=1 // pred_fallthru
      _
    // Predicated region
    $region14: #{tpu_custom_call.1} parent=1 // pred_check
      _
    $region15: #{tpu_custom_call.1} parent=1 // pred_check_branch
      %34 = sbr.rel (0) target = $region17
    $region16: #{tpu_custom_call.1} parent=1 // pred_region
      %35 = dma.done [#allocation8], 128
    $region17: #{tpu_custom_call.1} parent=1 // pred_fallthru
      _
    %p36 = scmp.eq.s32.totalorder 0, 0
    // Predicated region
    $region18: #{tpu_custom_call.1} parent=1 // pred_check
      %p37 = pneg %p36
    $region19: #{tpu_custom_call.1} parent=1 // pred_check_branch
      %39 = sbr.rel (%p37) target = $region21
    $region20: #{tpu_custom_call.1} parent=1 // pred_region
      %vm40 = vcmask 122880
      %41 = vst.msk [vmem:[#allocation2] sm:$0x1] %vm40, 0.0
      %42 = vst.msk [vmem:[#allocation3] sm:$0x1] %vm40, 0.0
    $region21: #{tpu_custom_call.1} parent=1 // pred_fallthru
      _
    %v43 = vld [vmem:[#allocation4] sm:$0xff]
    %v44 = vcvt.s32.f32 %v43
    %v45 = vld [vmem:[#allocation7] sm:$0xff]
    %v46 = vxor.u32 %v45, 2147483648
    %v47 = vmul.f32 %v46, 1.442695
    %v48 = vpow.pop %v47
    %v49 = vadd.f32 %v48, 1.0
    %v50 = vrcp.pop %v49
    %v51 = vmul.f32 1.0, %v50
    %v52 = vmul.f32 %v51, %v44
    %v53 = vadd.f32 %v44, %v51
    %v54 = vld [vmem:[#allocation2] sm:$0x1]
    %vm55 = vcmask 130048
    %v56 = vsel %vm55, %v52, 0.0
    %v57 = vrot.slane %v56, 4
    %v58 = vadd.f32 %v56, %v57
    %v59 = vrot.slane %v58, 2
    %v60 = vadd.f32 %v58, %v59
    %v61 = vrot.slane %v60, 1
    %v62 = vadd.f32 %v60, %v61
    %v63 = vadd.f32 %v54, %v62
    %vm64 = vcmask 122880
    %65 = vst.msk [vmem:[#allocation2] sm:$0x1] %vm64, %v63
    %v66 = vld [vmem:[#allocation3] sm:$0x1]
    %v67 = vsel %vm55, %v53, 0.0
    %v68 = vrot.slane %v67, 4
    %v69 = vadd.f32 %v67, %v68
    %v70 = vrot.slane %v69, 2
    %v71 = vadd.f32 %v69, %v70
    %v72 = vrot.slane %v71, 1
    %v73 = vadd.f32 %v71, %v72
    %v74 = vadd.f32 %v66, %v73
    %75 = vst.msk [vmem:[#allocation3] sm:$0x1] %vm64, %v74
    // Predicated region
    $region22: #{tpu_custom_call.1} parent=1 // pred_check
      %p76 = pneg %p36
    $region23: #{tpu_custom_call.1} parent=1 // pred_check_branch
      %78 = sbr.rel (%p76) target = $region25
    $region24: #{tpu_custom_call.1} parent=1 // pred_region
      %v79 = vld [vmem:[#allocation2] sm:$0x1]
      %v80 = vmul.f32 %v79, 2.0
      %v81 = vld [vmem:[#allocation3] sm:$0x1]
      %v82 = vadd.f32 %v81, 1e-16
      %v83 = vrcp.pop %v82
      %v84 = vmul.f32 %v80, %v83
      %v85 = vsub.f32 1.0, %v84
      %86 = vst.msk [vmem:[#allocation9] sm:$0x1] %vm64, %v85
    $region25: #{tpu_custom_call.1} parent=1 // pred_fallthru
      _
    // Predicated region
    $region26: #{tpu_custom_call.1} parent=1 // pred_check
      _
    $region27: #{tpu_custom_call.1} parent=1 // pred_check_branch
      %88 = sbr.rel (0) target = $region29
    $region28: #{tpu_custom_call.1} parent=1 // pred_region
      %s90 = ssub.s32 16, 16
      %91 = vsyncadd [#allocation6], %s90
      %s93 = sshll.u32 [#allocation9], 4
      %s94 = int_to_ptr.vmem [resolvable:$true] %s93
      %96 = dma.vmem_to_hbm [thread:$0]  %s94, 16, %s2, [#allocation6]
    $region29: #{tpu_custom_call.1} parent=1 // pred_fallthru
      _
    // Predicated region
    $region30: #{tpu_custom_call.1} parent=1 // pred_check
      _
    $region31: #{tpu_custom_call.1} parent=1 // pred_check_branch
      %98 = sbr.rel (0) target = $region33
    $region32: #{tpu_custom_call.1} parent=1 // pred_region
      %99 = dma.done [#allocation6], 16
    $region33: #{tpu_custom_call.1} parent=1 // pred_fallthru
      _
    %100 = vsyncpa [#allocation5], 1
    %101 = vsyncpa [#allocation8], 1
    %102 = vsyncpa [#allocation6], 1

</llo_original>
